<compile_context>
chip_gen: v7x
topology: tpu7x:2x2x1
jax: 0.10.0
libtpu: 0.0.40
codegen_flags: <defaults>
</compile_context>

<pallas_src>
import functools

import jax
import jax.numpy as jnp
from jax.experimental import pallas as pl
from jax.experimental.pallas import tpu as pltpu


def _round_up(x, m):
    return ((x + m - 1) // m) * m


@functools.partial(jax.jit, static_argnames=("tile_b", "use_bf16"))
def net_forward(x, w1, b1, w2, b2, w3, b3, *, tile_b=512, use_bf16=False):
    """3-layer MLP (ReLU, ReLU, Sigmoid) as a single fused Pallas TPU kernel.

    Weights are stored (in_features, out_features); biases are 1-D.  This is
    mathematically identical to PyTorch's x @ W.T + b with W stored (out, in).
    """
    batch, state_space = x.shape
    h1_dim = w1.shape[1]                 # 24
    h2_dim = w2.shape[1]                 # 36
    action_space = w3.shape[1]

    lanes = 128
    out_pad = _round_up(action_space, lanes)   # lane-dense output width
    width = max(h1_dim, h2_dim, out_pad)       # = 128

    compute_dtype = jnp.bfloat16 if use_bf16 else jnp.float32

    # ---- pack 6 parameter tensors into 2 slabs (2 DMAs instead of 6) -------
    # Each layer's W occupies a row segment starting on an 8-row (sublane)
    # boundary; fc3's columns are zero-padded to `out_pad` lanes.
    s1 = 0
    s2 = _round_up(state_space, 8)
    s3 = s2 + _round_up(h1_dim, 8)
    rows = _round_up(s3 + h2_dim, 8)

    wp = jnp.zeros((rows, width), compute_dtype)
    wp = wp.at[s1:s1 + state_space, :h1_dim].set(w1.astype(compute_dtype))
    wp = wp.at[s2:s2 + h1_dim, :h2_dim].set(w2.astype(compute_dtype))
    wp = wp.at[s3:s3 + h2_dim, :action_space].set(w3.astype(compute_dtype))

    bp = jnp.zeros((3, width), jnp.float32)    # biases stay f32 (v5e elementwise)
    bp = bp.at[0, :h1_dim].set(b1.reshape(-1).astype(jnp.float32))
    bp = bp.at[1, :h2_dim].set(b2.reshape(-1).astype(jnp.float32))
    bp = bp.at[2, :action_space].set(b3.reshape(-1).astype(jnp.float32))

    # ---- batch tiling (degenerates to a single grid step for small batch) --
    tb = _round_up(min(tile_b, _round_up(batch, 8)), 8)
    b_pad = _round_up(batch, tb)
    x_c = x.astype(compute_dtype)
    if b_pad != batch:
        x_c = jnp.pad(x_c, ((0, b_pad - batch), (0, 0)))
    grid = (b_pad // tb,)

    def kernel(x_ref, w_ref, b_ref, o_ref):
        xb = x_ref[...]                                  # (tb, state_space)
        w1_ = w_ref[s1:s1 + state_space, :h1_dim]
        w2_ = w_ref[s2:s2 + h1_dim, :h2_dim]
        w3_ = w_ref[s3:s3 + h2_dim, :]                   # (h2_dim, out_pad)
        b1_ = b_ref[0:1, :h1_dim]
        b2_ = b_ref[1:2, :h2_dim]
        b3_ = b_ref[2:3, :]

        # fc1 + ReLU  (MXU, f32 accumulation)
        h1 = jnp.dot(xb, w1_, preferred_element_type=jnp.float32) + b1_
        h1 = jnp.maximum(h1, 0.0)
        # fc2 + ReLU
        h2 = jnp.dot(h1.astype(compute_dtype), w2_,
                     preferred_element_type=jnp.float32) + b2_
        h2 = jnp.maximum(h2, 0.0)
        # fc3 + sigmoid: exp and approx reciprocal both go to the EUP slot,
        # keeping the VALU free; lane-dense (tb, 128) store.
        h3 = jnp.dot(h2.astype(compute_dtype), w3_,
                     preferred_element_type=jnp.float32) + b3_
        o_ref[...] = pl.reciprocal(1.0 + jnp.exp(-h3),
                                   approx=True).astype(o_ref.dtype)

    out = pl.pallas_call(
        kernel,
        out_shape=jax.ShapeDtypeStruct((b_pad, out_pad), jnp.float32),
        grid=grid,
        in_specs=[
            pl.BlockSpec((tb, state_space), lambda i: (i, 0)),  # tiled over batch
            pl.BlockSpec((rows, width), lambda i: (0, 0)),      # resident weights
            pl.BlockSpec((3, width), lambda i: (0, 0)),         # resident biases
        ],
        out_specs=pl.BlockSpec((tb, out_pad), lambda i: (i, 0)),
        compiler_params=pltpu.CompilerParams(
            dimension_semantics=("parallel",)),                 # v7x megacore
    )(x_c, wp, bp)

    return out[:batch, :action_space]


def init_params(key, state_space, action_space):
    """U(-1/sqrt(fan_in), 1/sqrt(fan_in)) init like nn.Linear; W is (in, out)."""
    dims = [(state_space, 24), (24, 36), (36, action_space)]
    params = []
    for fan_in, fan_out in dims:
        key, kw, kb = jax.random.split(key, 3)
        bound = 1.0 / (fan_in ** 0.5)
        w = jax.random.uniform(kw, (fan_in, fan_out), jnp.float32,
                               minval=-bound, maxval=bound)
        b = jax.random.uniform(kb, (fan_out,), jnp.float32,
                               minval=-bound, maxval=bound)
        params.extend([w, b])
    return params


def _ref_forward(x, w1, b1, w2, b2, w3, b3):
    h = jnp.maximum(x @ w1 + b1, 0.0)
    h = jnp.maximum(h @ w2 + b2, 0.0)
    return 1.0 / (1.0 + jnp.exp(-(h @ w3 + b3)))


if __name__ == "__main__":
    state_space = 4      # e.g. CartPole observation dim
    action_space = 2
    batch = 8

    key = jax.random.PRNGKey(0)
    key, kx = jax.random.split(key)
    x = jax.random.normal(kx, (batch, state_space), jnp.float32)
    params = init_params(key, state_space, action_space)

    # Small-batch path (single grid step), f32.
    out = jax.block_until_ready(net_forward(x, *params))
    ref = _ref_forward(x, *params)
    assert out.shape == (batch, action_space)
    assert jnp.allclose(out, ref, atol=5e-3, rtol=5e-3)   # approx-recip sigmoid

    # Large-batch path: tiled "parallel" grid, padded batch (1000 -> 1024).
    xb = jax.random.normal(jax.random.PRNGKey(1), (1000, state_space),
                           jnp.float32)
    out_b = jax.block_until_ready(net_forward(xb, *params, tile_b=256))
    ref_b = _ref_forward(xb, *params)
    assert out_b.shape == (1000, action_space)
    assert jnp.allclose(out_b, ref_b, atol=5e-3, rtol=5e-3)

    # bf16 MXU path (v6e/v7x DMA-byte saver); looser tolerance for bf16 inputs.
    out_bf = jax.block_until_ready(net_forward(x, *params, use_bf16=True))
    assert jnp.allclose(out_bf, ref, atol=5e-2, rtol=5e-2)

    print("KERNEL_OK")
</pallas_src>

<mosaic_0001>
module attributes {stable_mosaic.version = 11 : i64} {
  func.func @kernel(%arg0: i32, %arg1: memref<8x4xf32, #tpu.memory_space<vmem>>, %arg2: memref<72x128xf32, #tpu.memory_space<vmem>>, %arg3: memref<3x128xf32, #tpu.memory_space<vmem>>, %arg4: memref<8x128xf32, #tpu.memory_space<vmem>>) attributes {dimension_semantics = [#tpu.dimension_semantics<parallel>], iteration_bounds = array<i64: 1>, scalar_prefetch = 0 : i64, scratch_operands = 0 : i64, tpu.core_type = #tpu.core_type<tc>, window_params = [{transform_indices = @transform_0, window_bounds = array<i64: 8, 4>}, {pipeline_mode = #tpu.pipeline_mode<synchronous>, transform_indices = @transform_1, window_bounds = array<i64: 72, 128>}, {pipeline_mode = #tpu.pipeline_mode<synchronous>, transform_indices = @transform_2, window_bounds = array<i64: 3, 128>}, {transform_indices = @transform_3, window_bounds = array<i64: 8, 128>}]} {
    %c0 = arith.constant 0 : index
    %c0_0 = arith.constant 0 : index
    %0 = vector.load %arg1[%c0, %c0_0] : memref<8x4xf32, #tpu.memory_space<vmem>>, vector<8x4xf32>
    %c0_1 = arith.constant 0 : index
    %c0_2 = arith.constant 0 : index
    %1 = vector.load %arg2[%c0_1, %c0_2] : memref<72x128xf32, #tpu.memory_space<vmem>>, vector<4x24xf32>
    %c8 = arith.constant 8 : index
    %c0_3 = arith.constant 0 : index
    %2 = vector.load %arg2[%c8, %c0_3] : memref<72x128xf32, #tpu.memory_space<vmem>>, vector<24x36xf32>
    %c32 = arith.constant 32 : index
    %c0_4 = arith.constant 0 : index
    %3 = vector.load %arg2[%c32, %c0_4] : memref<72x128xf32, #tpu.memory_space<vmem>>, vector<36x128xf32>
    %c0_5 = arith.constant 0 : index
    %c0_6 = arith.constant 0 : index
    %4 = vector.load %arg3[%c0_5, %c0_6] : memref<3x128xf32, #tpu.memory_space<vmem>>, vector<1x24xf32>
    %c1 = arith.constant 1 : index
    %c0_7 = arith.constant 0 : index
    %5 = vector.load %arg3[%c1, %c0_7] : memref<3x128xf32, #tpu.memory_space<vmem>>, vector<1x36xf32>
    %c2 = arith.constant 2 : index
    %c0_8 = arith.constant 0 : index
    %6 = vector.load %arg3[%c2, %c0_8] : memref<3x128xf32, #tpu.memory_space<vmem>>, vector<1x128xf32>
    %cst = arith.constant dense<0.000000e+00> : vector<8x24xf32>
    %7 = tpu.matmul %0, %1, %cst {dimension_numbers = #tpu.dot_dimension_numbers<[1], [0], [0], [1], [0, 0, 1, 1], [], []>} : vector<8x4xf32>, vector<4x24xf32>, vector<8x24xf32> -> vector<8x24xf32>
    %8 = vector.broadcast %4 : vector<1x24xf32> to vector<8x24xf32>
    %9 = arith.addf %7, %8 : vector<8x24xf32>
    %cst_9 = arith.constant 0.000000e+00 : f32
    %10 = vector.broadcast %cst_9 : f32 to vector<8x24xf32>
    %11 = arith.maximumf %9, %10 : vector<8x24xf32>
    %cst_10 = arith.constant dense<0.000000e+00> : vector<8x36xf32>
    %12 = tpu.matmul %11, %2, %cst_10 {dimension_numbers = #tpu.dot_dimension_numbers<[1], [0], [0], [1], [0, 0, 1, 1], [], []>} : vector<8x24xf32>, vector<24x36xf32>, vector<8x36xf32> -> vector<8x36xf32>
    %13 = vector.broadcast %5 : vector<1x36xf32> to vector<8x36xf32>
    %14 = arith.addf %12, %13 : vector<8x36xf32>
    %cst_11 = arith.constant 0.000000e+00 : f32
    %15 = vector.broadcast %cst_11 : f32 to vector<8x36xf32>
    %16 = arith.maximumf %14, %15 : vector<8x36xf32>
    %cst_12 = arith.constant dense<0.000000e+00> : vector<8x128xf32>
    %17 = tpu.matmul %16, %3, %cst_12 {dimension_numbers = #tpu.dot_dimension_numbers<[1], [0], [0], [1], [0, 0, 1, 1], [], []>} : vector<8x36xf32>, vector<36x128xf32>, vector<8x128xf32> -> vector<8x128xf32>
    %18 = vector.broadcast %6 : vector<1x128xf32> to vector<8x128xf32>
    %19 = arith.addf %17, %18 : vector<8x128xf32>
    %cst_13 = arith.constant 0.000000e+00 : f32
    %20 = vector.broadcast %cst_13 : f32 to vector<8x128xf32>
    %21 = arith.subf %20, %19 : vector<8x128xf32>
    %22 = math.exp %21 : vector<8x128xf32>
    %cst_14 = arith.constant 1.000000e+00 : f32
    %23 = vector.broadcast %cst_14 : f32 to vector<8x128xf32>
    %24 = arith.addf %23, %22 : vector<8x128xf32>
    %25 = tpu.reciprocal %24 {approx = true} : vector<8x128xf32> -> vector<8x128xf32>
    %c0_15 = arith.constant 0 : index
    %c0_16 = arith.constant 0 : index
    %26 = vector.load %arg4[%c0_15, %c0_16] : memref<8x128xf32, #tpu.memory_space<vmem>>, vector<8x128xf32>
    tpu.vector_store %arg4[%c0_15, %c0_16], %25 {strides = array<i32>} : memref<8x128xf32, #tpu.memory_space<vmem>>, vector<8x128xf32>,
    return
  }
  func.func @transform_0(%arg0: i32) -> (i32, i32) {
    %c0_i32 = arith.constant 0 : i32
    %c0_i32_0 = arith.constant 0 : i32
    return %arg0, %c0_i32 : i32, i32
  }
  func.func @transform_1(%arg0: i32) -> (i32, i32) {
    %c0_i32 = arith.constant 0 : i32
    %c0_i32_0 = arith.constant 0 : i32
    %c0_i32_1 = arith.constant 0 : i32
    return %c0_i32, %c0_i32_0 : i32, i32
  }
  func.func @transform_2(%arg0: i32) -> (i32, i32) {
    %c0_i32 = arith.constant 0 : i32
    %c0_i32_0 = arith.constant 0 : i32
    %c0_i32_1 = arith.constant 0 : i32
    return %c0_i32, %c0_i32_0 : i32, i32
  }
  func.func @transform_3(%arg0: i32) -> (i32, i32) {
    %c0_i32 = arith.constant 0 : i32
    %c0_i32_0 = arith.constant 0 : i32
    return %arg0, %c0_i32 : i32, i32
  }
}

</mosaic_0001>

<llo_original>
// kernel: net_forward.1
$region0: #{net_forward.1}
  #allocation0 [shape = 'u32[]', space=smem, size = 0x4, offset = 0x4, fixed_abs, tag = 'smem constant byte address 0x4 - core index']
  #allocation1 [shape = 'u32[144,128]{1,0:T(1,128)}', space=vmem, size = 0x12000, scoped, tag = 'internal scratch']
  %s0 = inlined_call_operand.vmem [shape: f32[8,4], index: 0, kind: input, shape index: {}]
  %s1 = inlined_call_operand.vmem [shape: f32[72,128], index: 1, kind: input, shape index: {}]
  %s2 = inlined_call_operand.vmem [shape: f32[3,128], index: 2, kind: input, shape index: {}]
  %s3 = inlined_call_operand.vmem [shape: f32[8,128], index: 3, kind: output, shape index: {}]
  %s4 = sld [smem:[#allocation0]]
  $region22: #{net_forward.1} parent=0
    _
  %s6 = ssub.s32 1, %s4
  %s7 = scalar_select 0, %s6, %s4
  // Predicated region
  $region2: #{net_forward.1} parent=0 // pred_check
    _
  $region3: #{net_forward.1} parent=0 // pred_check_branch
    %9 = sbr.rel (0) target = $region5
  $region4: #{net_forward.1} parent=0 // pred_region
    _
  $region5: #{net_forward.1} parent=0 // pred_fallthru
    _
  // Predicated region
  $region6: #{net_forward.1} parent=0 // pred_check
    _
  $region7: #{net_forward.1} parent=0 // pred_check_branch
    %11 = sbr.rel (0) target = $region9
  $region8: #{net_forward.1} parent=0 // pred_region
    _
  $region9: #{net_forward.1} parent=0 // pred_fallthru
    _
  // Predicated region
  $region10: #{net_forward.1} parent=0 // pred_check
    _
  $region11: #{net_forward.1} parent=0 // pred_check_branch
    %13 = sbr.rel (0) target = $region13
  $region12: #{net_forward.1} parent=0 // pred_region
    _
  $region13: #{net_forward.1} parent=0 // pred_fallthru
    _
  %v14 = vld [vmem:[%s0] sm:$0xff]
  %v15 = vld [vmem:[%s1] sm:$0xf]
  %v16 = vld [vmem:[%s1 + $0x8] sm:$0xff]
  %v17 = vld [vmem:[%s1 + $0x10] sm:$0xff]
  %v18 = vld [vmem:[%s1 + $0x18] sm:$0xff]
  %v19 = vld [vmem:[%s1 + $0x20] sm:$0xff]
  %v20 = vld [vmem:[%s1 + $0x28] sm:$0xff]
  %v21 = vld [vmem:[%s1 + $0x30] sm:$0xff]
  %v22 = vld [vmem:[%s1 + $0x38] sm:$0xff]
  %v23 = vld [vmem:[%s1 + $0x40] sm:$0xf]
  %v24 = vld [vmem:[%s2] sm:$0x1]
  %v25 = vld [vmem:[%s2 + $0x1] sm:$0x1]
  %v26 = vld [vmem:[%s2 + $0x2] sm:$0x1]
  %v27 = vlaneseq
  %v28 = vshrl.u32 %v27, 7
  %v29 = vsub.s32 0, %v28
  %v30 = vrot.slane %v24, %v29
  %vm31 = vcmask 31744
  %v33 = vsel %vm31, %v14, 0
  %vm35 = vcmask 1043456
  %v37 = vsel %vm35, %v15, 0
  %39 = vmatprep.subr.mxu0 0.0
  %40 = vmatpush1.msra.mxu0 %v37
  %41 = vmatprep.subr.mxu0 0.0
  %42 = vmatpush1.msra.mxu0 0.0
  %43 = vmatprep.subr.mxu0 0.0
  %44 = vmatpush1.msra.mxu0 0.0
  %45 = vmatprep.subr.mxu0 0.0
  %46 = vmatpush1.msra.mxu0 0.0
  %47 = vmatprep.subr.mxu0 0.0
  %48 = vmatpush1.msra.mxu0 0.0
  %49 = vmatprep.subr.mxu0 0.0
  %50 = vmatpush1.msra.mxu0 0.0
  %51 = vmatprep.subr.mxu0 0.0
  %52 = vmatpush1.msra.mxu0 0.0
  %53 = vmatprep.subr.mxu0 0.0
  %54 = vmatpush1.msra.mxu0 0.0
  %55 = vmatprep.subr.mxu0 0.0
  %56 = vmatpush1.msra.mxu0 0.0
  %57 = vmatprep.subr.mxu0 0.0
  %58 = vmatpush1.msra.mxu0 0.0
  %59 = vmatprep.subr.mxu0 0.0
  %60 = vmatpush1.msra.mxu0 0.0
  %61 = vmatprep.subr.mxu0 0.0
  %62 = vmatpush1.msra.mxu0 0.0
  %63 = vmatprep.subr.mxu0 0.0
  %64 = vmatpush1.msra.mxu0 0.0
  %65 = vmatprep.subr.mxu0 0.0
  %66 = vmatpush1.msra.mxu0 0.0
  %67 = vmatprep.subr.mxu0 0.0
  %68 = vmatpush1.msra.mxu0 0.0
  %69 = vmatprep.subr.mxu0 0.0
  %70 = vmatpush1.msra.mxu0 0.0
  %71 = vmatprep.subr.mxu0 0.0
  %72 = vmatpush1.msra.mxu0 0.0
  %73 = vmatprep.subr.mxu0 0.0
  %74 = vmatpush1.msra.mxu0 0.0
  %75 = vmatprep.subr.mxu0 0.0
  %76 = vmatpush1.msra.mxu0 0.0
  %77 = vmatprep.subr.mxu0 0.0
  %78 = vmatpush1.msra.mxu0 0.0
  %79 = vmatprep.subr.mxu0 0.0
  %80 = vmatpush1.msra.mxu0 0.0
  %81 = vmatprep.subr.mxu0 0.0
  %82 = vmatpush1.msra.mxu0 0.0
  %83 = vmatprep.subr.mxu0 0.0
  %84 = vmatpush1.msra.mxu0 0.0
  %85 = vmatprep.subr.mxu0 0.0
  %86 = vmatpush1.msra.mxu0 0.0
  %87 = vmatprep.subr.mxu0 0.0
  %88 = vmatpush1.msra.mxu0 0.0
  %89 = vmatprep.subr.mxu0 0.0
  %90 = vmatpush1.msra.mxu0 0.0
  %91 = vmatprep.subr.mxu0 0.0
  %92 = vmatpush1.msra.mxu0 0.0
  %93 = vmatprep.subr.mxu0 0.0
  %94 = vmatpush1.msra.mxu0 0.0
  %95 = vmatprep.subr.mxu0 0.0
  %96 = vmatpush1.msra.mxu0 0.0
  %97 = vmatprep.subr.mxu0 0.0
  %98 = vmatpush1.msra.mxu0 0.0
  %99 = vmatprep.subr.mxu0 0.0
  %100 = vmatpush1.msra.mxu0 0.0
  %101 = vmatprep.subr.mxu0 0.0
  %102 = vmatpush1.msra.mxu0 0.0
  %103 = vmatprep.mubr.f32.mxu0 0.0
  %104 = vmatmul.mubr.f32.gmra.mrb[0].mxu0 %v33
  %v105 = vpop.f32.mrb[0].mxu0
  %v106 = vadd.f32 %v30, %v105
  %v107 = vpop.f32.mrb[0].mxu0
  %108 = vdwg.mxu0
  %v109 = vmax.f32 %v106, 0.0
  %v110 = vlaneseq
  %v111 = vshrl.u32 %v110, 7
  %v112 = vsub.s32 0, %v111
  %v113 = vrot.slane %v25, %v112
  %vm114 = vcmask 195584
  %v116 = vsel %vm114, %v109, 0
  %118 = vmatprep.subr.mxu0 0.0
  %119 = vmatpush1.msra.mxu0 %v16
  %120 = vmatprep.subr.mxu0 0.0
  %121 = vmatpush1.msra.mxu0 %v17
  %122 = vmatprep.subr.mxu0 0.0
  %123 = vmatpush1.msra.mxu0 %v18
  %124 = vmatprep.subr.mxu0 0.0
  %125 = vmatpush1.msra.mxu0 0.0
  %126 = vmatprep.subr.mxu0 0.0
  %127 = vmatpush1.msra.mxu0 0.0
  %128 = vmatprep.subr.mxu0 0.0
  %129 = vmatpush1.msra.mxu0 0.0
  %130 = vmatprep.subr.mxu0 0.0
  %131 = vmatpush1.msra.mxu0 0.0
  %132 = vmatprep.subr.mxu0 0.0
  %133 = vmatpush1.msra.mxu0 0.0
  %134 = vmatprep.subr.mxu0 0.0
  %135 = vmatpush1.msra.mxu0 0.0
  %136 = vmatprep.subr.mxu0 0.0
  %137 = vmatpush1.msra.mxu0 0.0
  %138 = vmatprep.subr.mxu0 0.0
  %139 = vmatpush1.msra.mxu0 0.0
  %140 = vmatprep.subr.mxu0 0.0
  %141 = vmatpush1.msra.mxu0 0.0
  %142 = vmatprep.subr.mxu0 0.0
  %143 = vmatpush1.msra.mxu0 0.0
  %144 = vmatprep.subr.mxu0 0.0
  %145 = vmatpush1.msra.mxu0 0.0
  %146 = vmatprep.subr.mxu0 0.0
  %147 = vmatpush1.msra.mxu0 0.0
  %148 = vmatprep.subr.mxu0 0.0
  %149 = vmatpush1.msra.mxu0 0.0
  %150 = vmatprep.subr.mxu0 0.0
  %151 = vmatpush1.msra.mxu0 0.0
  %152 = vmatprep.subr.mxu0 0.0
  %153 = vmatpush1.msra.mxu0 0.0
  %154 = vmatprep.subr.mxu0 0.0
  %155 = vmatpush1.msra.mxu0 0.0
  %156 = vmatprep.subr.mxu0 0.0
  %157 = vmatpush1.msra.mxu0 0.0
  %158 = vmatprep.subr.mxu0 0.0
  %159 = vmatpush1.msra.mxu0 0.0
  %160 = vmatprep.subr.mxu0 0.0
  %161 = vmatpush1.msra.mxu0 0.0
  %162 = vmatprep.subr.mxu0 0.0
  %163 = vmatpush1.msra.mxu0 0.0
  %164 = vmatprep.subr.mxu0 0.0
  %165 = vmatpush1.msra.mxu0 0.0
  %166 = vmatprep.subr.mxu0 0.0
  %167 = vmatpush1.msra.mxu0 0.0
  %168 = vmatprep.subr.mxu0 0.0
  %169 = vmatpush1.msra.mxu0 0.0
  %170 = vmatprep.subr.mxu0 0.0
  %171 = vmatpush1.msra.mxu0 0.0
  %172 = vmatprep.subr.mxu0 0.0
  %173 = vmatpush1.msra.mxu0 0.0
  %174 = vmatprep.subr.mxu0 0.0
  %175 = vmatpush1.msra.mxu0 0.0
  %176 = vmatprep.subr.mxu0 0.0
  %177 = vmatpush1.msra.mxu0 0.0
  %178 = vmatprep.subr.mxu0 0.0
  %179 = vmatpush1.msra.mxu0 0.0
  %180 = vmatprep.subr.mxu0 0.0
  %181 = vmatpush1.msra.mxu0 0.0
  %182 = vmatprep.mubr.f32.mxu0 0.0
  %183 = vmatmul.mubr.f32.gmra.mrb[0].mxu0 %v116
  %v184 = vpop.f32.mrb[0].mxu0
  %v185 = vadd.f32 %v113, %v184
  %v186 = vpop.f32.mrb[0].mxu0
  %187 = vdwg.mxu0
  %v188 = vmax.f32 %v185, 0.0
  %v189 = vlaneseq
  %v190 = vshrl.u32 %v189, 7
  %v191 = vsub.s32 0, %v190
  %v192 = vrot.slane %v26, %v191
  %vm193 = vcmask 293888
  %v195 = vsel %vm193, %v188, 0
  %v198 = vsel %vm35, %v23, 0
  %200 = vmatprep.subr.mxu0 0.0
  %201 = vmatpush1.msra.mxu0 %v19
  %202 = vmatprep.subr.mxu0 0.0
  %203 = vmatpush1.msra.mxu0 %v20
  %204 = vmatprep.subr.mxu0 0.0
  %205 = vmatpush1.msra.mxu0 %v21
  %206 = vmatprep.subr.mxu0 0.0
  %207 = vmatpush1.msra.mxu0 %v22
  %208 = vmatprep.subr.mxu0 0.0
  %209 = vmatpush1.msra.mxu0 %v198
  %210 = vmatprep.subr.mxu0 0.0
  %211 = vmatpush1.msra.mxu0 0.0
  %212 = vmatprep.subr.mxu0 0.0
  %213 = vmatpush1.msra.mxu0 0.0
  %214 = vmatprep.subr.mxu0 0.0
  %215 = vmatpush1.msra.mxu0 0.0
  %216 = vmatprep.subr.mxu0 0.0
  %217 = vmatpush1.msra.mxu0 0.0
  %218 = vmatprep.subr.mxu0 0.0
  %219 = vmatpush1.msra.mxu0 0.0
  %220 = vmatprep.subr.mxu0 0.0
  %221 = vmatpush1.msra.mxu0 0.0
  %222 = vmatprep.subr.mxu0 0.0
  %223 = vmatpush1.msra.mxu0 0.0
  %224 = vmatprep.subr.mxu0 0.0
  %225 = vmatpush1.msra.mxu0 0.0
  %226 = vmatprep.subr.mxu0 0.0
  %227 = vmatpush1.msra.mxu0 0.0
  %228 = vmatprep.subr.mxu0 0.0
  %229 = vmatpush1.msra.mxu0 0.0
  %230 = vmatprep.subr.mxu0 0.0
  %231 = vmatpush1.msra.mxu0 0.0
  %232 = vmatprep.subr.mxu0 0.0
  %233 = vmatpush1.msra.mxu0 0.0
  %234 = vmatprep.subr.mxu0 0.0
  %235 = vmatpush1.msra.mxu0 0.0
  %236 = vmatprep.subr.mxu0 0.0
  %237 = vmatpush1.msra.mxu0 0.0
  %238 = vmatprep.subr.mxu0 0.0
  %239 = vmatpush1.msra.mxu0 0.0
  %240 = vmatprep.subr.mxu0 0.0
  %241 = vmatpush1.msra.mxu0 0.0
  %242 = vmatprep.subr.mxu0 0.0
  %243 = vmatpush1.msra.mxu0 0.0
  %244 = vmatprep.subr.mxu0 0.0
  %245 = vmatpush1.msra.mxu0 0.0
  %246 = vmatprep.subr.mxu0 0.0
  %247 = vmatpush1.msra.mxu0 0.0
  %248 = vmatprep.subr.mxu0 0.0
  %249 = vmatpush1.msra.mxu0 0.0
  %250 = vmatprep.subr.mxu0 0.0
  %251 = vmatpush1.msra.mxu0 0.0
  %252 = vmatprep.subr.mxu0 0.0
  %253 = vmatpush1.msra.mxu0 0.0
  %254 = vmatprep.subr.mxu0 0.0
  %255 = vmatpush1.msra.mxu0 0.0
  %256 = vmatprep.subr.mxu0 0.0
  %257 = vmatpush1.msra.mxu0 0.0
  %258 = vmatprep.subr.mxu0 0.0
  %259 = vmatpush1.msra.mxu0 0.0
  %260 = vmatprep.subr.mxu0 0.0
  %261 = vmatpush1.msra.mxu0 0.0
  %262 = vmatprep.subr.mxu0 0.0
  %263 = vmatpush1.msra.mxu0 0.0
  %264 = vmatprep.mubr.f32.mxu0 0.0
  %265 = vmatmul.mubr.f32.gmra.mrb[0].mxu0 %v195
  %v266 = vpop.f32.mrb[0].mxu0
  %v267 = vadd.f32 %v192, %v266
  %v268 = vpop.f32.mrb[0].mxu0
  %269 = vdwg.mxu0
  %v270 = vsub.f32 0.0, %v267
  %v271 = vmul.f32 %v270, 1.442695
  %v272 = vpow.pop %v271
  %v273 = vadd.f32 %v272, 1.0
  %v274 = vrcp.pop %v273
  %275 = vst [vmem:[%s3] sm:$0xff] %v274
  // Predicated region
  $region14: #{net_forward.1} parent=0 // pred_check
    _
  $region15: #{net_forward.1} parent=0 // pred_check_branch
    %277 = sbr.rel (0) target = $region17
  $region16: #{net_forward.1} parent=0 // pred_region
    _
  $region17: #{net_forward.1} parent=0 // pred_fallthru
    _
  // Predicated region
  $region18: #{net_forward.1} parent=0 // pred_check
    _
  $region19: #{net_forward.1} parent=0 // pred_check_branch
    %279 = sbr.rel (0) target = $region21
  $region20: #{net_forward.1} parent=0 // pred_region
    _
  $region21: #{net_forward.1} parent=0 // pred_fallthru
    _

</llo_original>
